<compile_context>
chip_gen: v7x
topology: tpu7x:2x2x1
jax: 0.10.0
libtpu: 0.0.40
codegen_flags: <defaults>
</compile_context>

<pallas_src>
import numpy as np
import jax
import jax.numpy as jnp
from jax import lax
from jax.experimental import pallas as pl
from jax.experimental.pallas import tpu as pltpu

EPS = 1e-5
LANE = 128                      # pad output channels / contraction dims to this
DEFAULT_TILE_M = 1024           # rows per grid step for large layers
_VMEM_LIMIT_CACHE = None


def _round_up(x, m):
    return (x + m - 1) // m * m


def _vmem_limit():
    """Scoped-VMEM limit: ~3/4 of physical VMEM (96 MiB on v5e/v6e, 48 MiB on v7x)."""
    global _VMEM_LIMIT_CACHE
    if _VMEM_LIMIT_CACHE is None:
        try:
            cap = pltpu.get_tpu_info().vmem_capacity_bytes
            _VMEM_LIMIT_CACHE = int(min(cap * 3 // 4, 96 * 1024 * 1024))
        except Exception:
            _VMEM_LIMIT_CACHE = 48 * 1024 * 1024
    return _VMEM_LIMIT_CACHE


def _compiler_params():
    return pltpu.CompilerParams(dimension_semantics=("parallel",),
                                vmem_limit_bytes=_vmem_limit())


def _choose_tile_m(m, tile_m, bytes_per_row):
    """Pick the row tile: bf16-packed (>=16), 256-aligned for large M, at least 2 grid
    steps when possible (megacore / v7x 2-TC), and capped so the double-buffered
    streaming working set stays within the VMEM budget."""
    align = 256 if m >= 512 else 16
    budget = int(_vmem_limit() * 0.6)
    cap = max(align, (budget // max(bytes_per_row, 1)) // align * align)
    half = _round_up((m + 1) // 2, align)          # >= 2 grid steps when M allows
    tm = max(align, min(tile_m, cap, half))
    return _round_up(tm, align)


# ---------------------------------------------------------------------------
# Pallas kernels
# ---------------------------------------------------------------------------
def _conv_stats_kernel(taps_ref, w_ref, y_ref, stats_ref):
    # One deep MXU contraction per tile: (TM, Kp) @ (Kp, Cp), bf16 in, f32 acc.
    y = jnp.dot(taps_ref[...], w_ref[...], preferred_element_type=jnp.float32)
    y_ref[...] = y.astype(y_ref.dtype)                               # bf16 store
    # Stats from the f32 accumulator (before the bf16 cast); direct row writes.
    stats_ref[0, 0:1, :] = jnp.sum(y, axis=0, keepdims=True)
    stats_ref[0, 1:2, :] = jnp.sum(y * y, axis=0, keepdims=True)


def _conv_pair_stats_kernel(taps_ref, w_ref, xs_ref, wsc_ref,
                            y_ref, sc_ref, stats_ref):
    # conv2 (3x3, folded taps) and the 1x1 shortcut conv fused in one pass.
    y = jnp.dot(taps_ref[...], w_ref[...], preferred_element_type=jnp.float32)
    sc = jnp.dot(xs_ref[...], wsc_ref[...], preferred_element_type=jnp.float32)
    y_ref[...] = y.astype(y_ref.dtype)                               # bf16 stores
    sc_ref[...] = sc.astype(sc_ref.dtype)
    stats_ref[0, 0:1, :] = jnp.sum(y, axis=0, keepdims=True)
    stats_ref[0, 1:2, :] = jnp.sum(y * y, axis=0, keepdims=True)
    stats_ref[0, 2:3, :] = jnp.sum(sc, axis=0, keepdims=True)
    stats_ref[0, 3:4, :] = jnp.sum(sc * sc, axis=0, keepdims=True)


def _bn_add_relu_kernel(y_ref, sc_ref, ab_ref, o_ref):
    # ab rows: [scale_main, shift_main, scale_sc, shift_sc] (per channel, f32).
    y = y_ref[...].astype(jnp.float32) * ab_ref[0:1, :] + ab_ref[1:2, :]
    sc = sc_ref[...].astype(jnp.float32) * ab_ref[2:3, :] + ab_ref[3:4, :]
    o_ref[...] = jnp.maximum(y + sc, 0.0)


# ---------------------------------------------------------------------------
# pallas_call wrappers
# ---------------------------------------------------------------------------
def conv_stats(taps, w, tile_m):
    """taps (Mp, Kp) bf16, w (Kp, Cp) bf16 -> (pre-BN conv (Mp,Cp) bf16, stats (2,Cp) f32)."""
    mp, kc = taps.shape
    cp = w.shape[1]
    t = mp // tile_m
    cost = pl.CostEstimate(
        flops=2 * mp * kc * cp, transcendentals=0,
        bytes_accessed=2 * (mp * kc + kc * cp + mp * cp) + 4 * t * 2 * cp)
    y, stats = pl.pallas_call(
        _conv_stats_kernel,
        out_shape=(jax.ShapeDtypeStruct((mp, cp), jnp.bfloat16),
                   jax.ShapeDtypeStruct((t, 2, cp), jnp.float32)),
        grid=(t,),
        in_specs=[pl.BlockSpec((tile_m, kc), lambda i: (i, 0)),
                  pl.BlockSpec((kc, cp), lambda i: (0, 0),
                               pipeline_mode=pl.Buffered(1))],        # grid-invariant
        out_specs=(pl.BlockSpec((tile_m, cp), lambda i: (i, 0)),
                   pl.BlockSpec((1, 2, cp), lambda i: (i, 0, 0))),
        compiler_params=_compiler_params(),
        cost_estimate=cost,
    )(taps, w)
    return y, jnp.sum(stats, axis=0)


def conv_pair_stats(taps, w, xs, wsc, tile_m):
    """conv2 + fused 1x1 shortcut conv, plus BN partial stats for both."""
    mp, kc = taps.shape
    cp = w.shape[1]
    cin = xs.shape[1]
    t = mp // tile_m
    cost = pl.CostEstimate(
        flops=2 * mp * cp * (kc + cin), transcendentals=0,
        bytes_accessed=2 * (mp * kc + kc * cp + mp * cin + cin * cp + 2 * mp * cp)
                       + 4 * t * 4 * cp)
    y, sc, stats = pl.pallas_call(
        _conv_pair_stats_kernel,
        out_shape=(jax.ShapeDtypeStruct((mp, cp), jnp.bfloat16),
                   jax.ShapeDtypeStruct((mp, cp), jnp.bfloat16),
                   jax.ShapeDtypeStruct((t, 4, cp), jnp.float32)),
        grid=(t,),
        in_specs=[pl.BlockSpec((tile_m, kc), lambda i: (i, 0)),
                  pl.BlockSpec((kc, cp), lambda i: (0, 0),
                               pipeline_mode=pl.Buffered(1)),
                  pl.BlockSpec((tile_m, cin), lambda i: (i, 0)),
                  pl.BlockSpec((cin, cp), lambda i: (0, 0),
                               pipeline_mode=pl.Buffered(1))],
        out_specs=(pl.BlockSpec((tile_m, cp), lambda i: (i, 0)),
                   pl.BlockSpec((tile_m, cp), lambda i: (i, 0)),
                   pl.BlockSpec((1, 4, cp), lambda i: (i, 0, 0))),
        compiler_params=_compiler_params(),
        cost_estimate=cost,
    )(taps, w, xs, wsc)
    return y, sc, jnp.sum(stats, axis=0)


def bn_add_relu(y, sc, ab, tile_m):
    """relu((y*scale2+shift2) + (sc*scale_sc+shift_sc)), tiled over rows (bf16 in, f32 out)."""
    mp, cp = y.shape
    t = mp // tile_m
    cost = pl.CostEstimate(flops=6 * mp * cp, transcendentals=0,
                           bytes_accessed=2 * 2 * mp * cp + 4 * mp * cp + 4 * 4 * cp)
    return pl.pallas_call(
        _bn_add_relu_kernel,
        out_shape=jax.ShapeDtypeStruct((mp, cp), jnp.float32),
        grid=(t,),
        in_specs=[pl.BlockSpec((tile_m, cp), lambda i: (i, 0)),
                  pl.BlockSpec((tile_m, cp), lambda i: (i, 0)),
                  pl.BlockSpec((4, cp), lambda i: (0, 0),
                               pipeline_mode=pl.Buffered(1))],
        out_specs=pl.BlockSpec((tile_m, cp), lambda i: (i, 0)),
        compiler_params=_compiler_params(),
        cost_estimate=cost,
    )(y, sc, ab)


# ---------------------------------------------------------------------------
# Glue: im2col (lane-concatenated, bf16), weight flattening, LoRA merge, BN scale/shift
# ---------------------------------------------------------------------------
def conv3x3_im2col(x_nhwc, stride, kp):
    """(N,H,W,C) -> (M, kp) taps (lane-concatenated 9*C, zero-padded to kp)."""
    n, h, w, c = x_nhwc.shape
    xp = jnp.pad(x_nhwc, ((0, 0), (1, 1), (1, 1), (0, 0)))
    hout = (h + 2 - 3) // stride + 1
    wout = (w + 2 - 3) // stride + 1
    taps = []
    for kh in range(3):
        for kw in range(3):
            t = xp[:,
                   kh: kh + stride * (hout - 1) + 1: stride,
                   kw: kw + stride * (wout - 1) + 1: stride, :]
            taps.append(t.reshape(n * hout * wout, c))
    taps = jnp.concatenate(taps, axis=1)
    taps = jnp.pad(taps, ((0, 0), (0, kp - 9 * c)))
    return taps, (n, hout, wout)


def weight3x3_flat(w_oihw, cp, kp):
    """PyTorch (Cout, Cin, 3, 3) -> (kp, Cp), zero-padded K and output channels."""
    cout, cin = w_oihw.shape[0], w_oihw.shape[1]
    w = jnp.transpose(w_oihw, (2, 3, 1, 0)).reshape(9 * cin, cout)   # (kh*3+kw)*Cin + ci
    return jnp.pad(w, ((0, kp - 9 * cin), (0, cp - cout)))


def merge_lora(w, lora_A, lora_B, scaling):
    """Effective LoRA conv weight: W + (B @ A).reshape(W.shape) * scaling."""
    delta = (lora_B @ lora_A).reshape(w.shape) * scaling
    return w + delta


def _bn_scale_shift(stats2, gamma, beta, m_true):
    """stats2 = [sum; sumsq] over the true M rows -> per-channel affine (scale, shift)."""
    mean = stats2[0] / m_true
    var = jnp.maximum(stats2[1] / m_true - mean * mean, 0.0)   # biased batch variance
    scale = gamma * lax.rsqrt(var + EPS)
    shift = beta - mean * scale
    return scale, shift


def _pad_c(v, cp, fill=0.0):
    return jnp.pad(v.astype(jnp.float32), (0, cp - v.shape[0]), constant_values=fill)


# ---------------------------------------------------------------------------
# BasicBlock forward (NCHW in / NCHW out)
# ---------------------------------------------------------------------------
def basic_block_forward(x_nchw, params, stride, tile_m=DEFAULT_TILE_M):
    # Cast to bf16 BEFORE im2col so all tap / residual streams are half-width.
    x = jnp.transpose(x_nchw, (0, 2, 3, 1)).astype(jnp.bfloat16)     # NHWC bf16
    n, h, w, cin = x.shape
    planes = params["conv1_w"].shape[0]
    cp = _round_up(planes, LANE)                                     # lane-dense Cout
    kp1 = _round_up(9 * cin, LANE)                                   # MXU-aligned K
    kp2 = _round_up(9 * planes, LANE)
    cin_p = _round_up(cin, LANE)
    has_downsample = (stride != 1) or (cin != planes)

    taps1, (_, h1, w1) = conv3x3_im2col(x, stride, kp1)
    m = n * h1 * w1
    # Dominant per-row bf16 bytes (double-buffered streams of the fused conv2 pass).
    bpr = 4 * (max(kp1, kp2 + (cin_p if has_downsample else 0)) + 2 * cp)
    tm = _choose_tile_m(m, tile_m, bpr)
    mp = _round_up(m, tm)

    def pad_rows(a):
        return jnp.pad(a, ((0, mp - a.shape[0]), (0, 0)))

    # --- conv1 (pass 1: matmul + partial BN stats) ----------------------------------
    w1f = weight3x3_flat(params["conv1_w"], cp, kp1).astype(jnp.bfloat16)
    y1, st1 = conv_stats(pad_rows(taps1), w1f, tm)
    scale1, shift1 = _bn_scale_shift(st1, _pad_c(params["bn1_g"], cp, 1.0),
                                     _pad_c(params["bn1_b"], cp), m)
    # BN1 + ReLU epilogue (elementwise glue) producing bf16 out1 (it only feeds a bf16 matmul).
    out1 = jnp.maximum(
        y1[:m, :planes].astype(jnp.float32) * scale1[:planes] + shift1[:planes], 0.0)
    out1 = out1.astype(jnp.bfloat16).reshape(n, h1, w1, planes)

    # --- conv2 (+ fused 1x1 shortcut conv) : pass 1 ----------------------------------
    taps2, _ = conv3x3_im2col(out1, 1, kp2)
    taps2 = pad_rows(taps2)
    w2f = weight3x3_flat(params["conv2_w"], cp, kp2).astype(jnp.bfloat16)

    if has_downsample:
        xs = x[:, ::stride, ::stride, :].reshape(m, cin)
        xs = jnp.pad(xs, ((0, 0), (0, cin_p - cin)))                  # bf16, K-padded
        wsc = jnp.pad(params["convsc_w"][:, :, 0, 0].T,
                      ((0, cin_p - cin), (0, cp - planes))).astype(jnp.bfloat16)
        y2, s2, st = conv_pair_stats(taps2, w2f, pad_rows(xs), wsc, tm)
        scale2, shift2 = _bn_scale_shift(st[:2], _pad_c(params["bn2_g"], cp, 1.0),
                                         _pad_c(params["bn2_b"], cp), m)
        scalesc, shiftsc = _bn_scale_shift(st[2:], _pad_c(params["bnsc_g"], cp, 1.0),
                                           _pad_c(params["bnsc_b"], cp), m)
    else:
        y2, st2 = conv_stats(taps2, w2f, tm)
        scale2, shift2 = _bn_scale_shift(st2, _pad_c(params["bn2_g"], cp, 1.0),
                                         _pad_c(params["bn2_b"], cp), m)
        # Identity shortcut: residual is x itself (cin == planes), passed as bf16
        # (no padded f32 materialization); scale=1 / shift=0 in the epilogue.
        s2 = pad_rows(jnp.pad(x.reshape(m, cin), ((0, 0), (0, cp - cin))))
        scalesc = jnp.ones((cp,), jnp.float32)
        shiftsc = jnp.zeros((cp,), jnp.float32)

    # --- pass 2: BN(conv2) + BN(shortcut) + add + ReLU -------------------------------
    ab = jnp.stack([scale2, shift2, scalesc, shiftsc], axis=0)        # (4, cp) f32
    out = bn_add_relu(y2, s2, ab, tm)
    out = out[:m, :planes].reshape(n, h1, w1, planes)
    return jnp.transpose(out, (0, 3, 1, 2))                           # back to NCHW


# ---------------------------------------------------------------------------
# Pure-JAX reference (bf16 conv operands / bf16 identity residual + f32 accumulation,
# mirroring the kernel's dtype choices; BN / epilogue in f32) — correctness check only.
# ---------------------------------------------------------------------------
def _ref_conv(x_nhwc, w_oihw, stride, pad):
    w = jnp.transpose(w_oihw, (2, 3, 1, 0))                           # HWIO
    return lax.conv_general_dilated(
        x_nhwc.astype(jnp.bfloat16), w.astype(jnp.bfloat16),
        (stride, stride), ((pad, pad), (pad, pad)),
        dimension_numbers=("NHWC", "HWIO", "NHWC"),
        preferred_element_type=jnp.float32)


def _ref_bn(x, g, b):
    mean = jnp.mean(x, axis=(0, 1, 2), keepdims=True)
    var = jnp.mean(jnp.square(x - mean), axis=(0, 1, 2), keepdims=True)
    return (x - mean) * lax.rsqrt(var + EPS) * g + b


def basic_block_ref(x_nchw, params, stride):
    x = jnp.transpose(x_nchw, (0, 2, 3, 1)).astype(jnp.float32)
    cin = x.shape[-1]
    planes = params["conv1_w"].shape[0]
    out = jax.nn.relu(_ref_bn(_ref_conv(x, params["conv1_w"], stride, 1),
                              params["bn1_g"], params["bn1_b"]))
    out = _ref_bn(_ref_conv(out, params["conv2_w"], 1, 1),
                  params["bn2_g"], params["bn2_b"])
    if stride != 1 or cin != planes:
        sc = _ref_bn(_ref_conv(x, params["convsc_w"], stride, 0),
                     params["bnsc_g"], params["bnsc_b"])
    else:
        sc = x.astype(jnp.bfloat16).astype(jnp.float32)   # mirror kernel's bf16 residual
    out = jax.nn.relu(out + sc)
    return jnp.transpose(out, (0, 3, 1, 2))


# ---------------------------------------------------------------------------
# Parameter construction (deterministic, synthetic)
# ---------------------------------------------------------------------------
def make_params(key, in_planes, planes, stride, r_nat=4):
    ks = jax.random.split(key, 12)

    def lora_conv_weight(kw, ka, cout, cin, ksz):
        w = jax.random.normal(kw, (cout, cin, ksz, ksz), jnp.float32) * 0.1
        # LoRA adapter (rank r_nat): lora_B == 0 at init, so merged weight == base weight.
        lora_A = jax.random.normal(ka, (r_nat * ksz, cin * ksz), jnp.float32) * 0.02
        lora_B = jnp.zeros((cout * ksz, r_nat * ksz), jnp.float32)
        return merge_lora(w, lora_A, lora_B, scaling=1.0 / r_nat)

    params = {
        "conv1_w": lora_conv_weight(ks[0], ks[1], planes, in_planes, 3),
        "conv2_w": lora_conv_weight(ks[2], ks[3], planes, planes, 3),
        "bn1_g": jax.random.normal(ks[4], (planes,), jnp.float32) * 0.1 + 1.0,
        "bn1_b": jax.random.normal(ks[5], (planes,), jnp.float32) * 0.1,
        "bn2_g": jax.random.normal(ks[6], (planes,), jnp.float32) * 0.1 + 1.0,
        "bn2_b": jax.random.normal(ks[7], (planes,), jnp.float32) * 0.1,
    }
    if stride != 1 or in_planes != planes:
        params["convsc_w"] = lora_conv_weight(ks[8], ks[9], planes, in_planes, 1)
        params["bnsc_g"] = jax.random.normal(ks[10], (planes,), jnp.float32) * 0.1 + 1.0
        params["bnsc_b"] = jax.random.normal(ks[11], (planes,), jnp.float32) * 0.1
    return params


# ---------------------------------------------------------------------------
if __name__ == "__main__":
    key = jax.random.PRNGKey(0)
    kx1, kx2, kp1, kp2 = jax.random.split(key, 4)
    TOL = dict(rtol=2e-2, atol=2e-2)   # bf16 intermediate streams in the kernel path

    # Config A: downsample shortcut (stride 2, channel expansion).
    n, in_planes, planes, h, w, stride = 2, 4, 8, 16, 16, 2
    x_a = jax.random.normal(kx1, (n, in_planes, h, w), jnp.float32)   # NCHW like PyTorch
    p_a = make_params(kp1, in_planes, planes, stride, r_nat=4)
    out_a = jax.block_until_ready(basic_block_forward(x_a, p_a, stride))
    ref_a = jax.block_until_ready(basic_block_ref(x_a, p_a, stride))
    np.testing.assert_allclose(np.asarray(out_a), np.asarray(ref_a), **TOL)

    # Same config with a small row tile: exercises the multi-tile "parallel" grid,
    # zero-row padding, and the cross-tile BN sum/sumsq reduction.
    out_a2 = jax.block_until_ready(basic_block_forward(x_a, p_a, stride, tile_m=48))
    np.testing.assert_allclose(np.asarray(out_a2), np.asarray(ref_a), **TOL)

    # Config B: identity shortcut (stride 1, in_planes == planes).
    n, in_planes, planes, h, w, stride = 2, 8, 8, 16, 16, 1
    x_b = jax.random.normal(kx2, (n, in_planes, h, w), jnp.float32)
    p_b = make_params(kp2, in_planes, planes, stride, r_nat=4)
    out_b = jax.block_until_ready(basic_block_forward(x_b, p_b, stride))
    ref_b = jax.block_until_ready(basic_block_ref(x_b, p_b, stride))
    np.testing.assert_allclose(np.asarray(out_b), np.asarray(ref_b), **TOL)

    print("KERNEL_OK")
</pallas_src>

<mosaic_0001>
module attributes {stable_mosaic.version = 11 : i64} {
  func.func @_conv_stats_kernel(%arg0: i32, %arg1: memref<64x128xbf16, #tpu.memory_space<vmem>>, %arg2: memref<128x128xbf16, #tpu.memory_space<vmem>>, %arg3: memref<64x128xbf16, #tpu.memory_space<vmem>>, %arg4: memref<1x2x128xf32, #tpu.memory_space<vmem>>) attributes {dimension_semantics = [#tpu.dimension_semantics<parallel>], iteration_bounds = array<i64: 2>, scalar_prefetch = 0 : i64, scratch_operands = 0 : i64, tpu.core_type = #tpu.core_type<tc>, window_params = [{transform_indices = @transform_0, window_bounds = array<i64: 64, 128>}, {pipeline_mode = #tpu.pipeline_mode<synchronous>, transform_indices = @transform_1, window_bounds = array<i64: 128, 128>}, {transform_indices = @transform_2, window_bounds = array<i64: 64, 128>}, {transform_indices = @transform_3, window_bounds = array<i64: 1, 2, 128>}]} {
    %c0 = arith.constant 0 : index
    %c0_0 = arith.constant 0 : index
    %0 = vector.load %arg1[%c0, %c0_0] : memref<64x128xbf16, #tpu.memory_space<vmem>>, vector<64x128xbf16>
    %c0_1 = arith.constant 0 : index
    %c0_2 = arith.constant 0 : index
    %1 = vector.load %arg2[%c0_1, %c0_2] : memref<128x128xbf16, #tpu.memory_space<vmem>>, vector<128x128xbf16>
    %cst = arith.constant dense<0.000000e+00> : vector<64x128xf32>
    %2 = tpu.matmul %0, %1, %cst {dimension_numbers = #tpu.dot_dimension_numbers<[1], [0], [0], [1], [0, 0, 1, 1], [], []>} : vector<64x128xbf16>, vector<128x128xbf16>, vector<64x128xf32> -> vector<64x128xf32>
    %3 = arith.truncf %2 : vector<64x128xf32> to vector<64x128xbf16>
    %c0_3 = arith.constant 0 : index
    %c0_4 = arith.constant 0 : index
    %4 = vector.load %arg3[%c0_3, %c0_4] : memref<64x128xbf16, #tpu.memory_space<vmem>>, vector<64x128xbf16>
    tpu.vector_store %arg3[%c0_3, %c0_4], %3 {strides = array<i32>} : memref<64x128xbf16, #tpu.memory_space<vmem>>, vector<64x128xbf16>,
    %cst_5 = arith.constant dense<0.000000e+00> : vector<128xf32>
    %5 = vector.multi_reduction <add>, %2, %cst_5 [0] : vector<64x128xf32> to vector<128xf32>
    %6 = vector.shape_cast %5 : vector<128xf32> to vector<1x128xf32>
    %c0_6 = arith.constant 0 : index
    %c0_7 = arith.constant 0 : index
    %c0_8 = arith.constant 0 : index
    %7 = vector.load %arg4[%c0_6, %c0_7, %c0_8] : memref<1x2x128xf32, #tpu.memory_space<vmem>>, vector<1x1x128xf32>
    %8 = vector.shape_cast %7 : vector<1x1x128xf32> to vector<1x128xf32>
    %9 = vector.shape_cast %6 : vector<1x128xf32> to vector<1x1x128xf32>
    tpu.vector_store %arg4[%c0_6, %c0_7, %c0_8], %9 {strides = array<i32>} : memref<1x2x128xf32, #tpu.memory_space<vmem>>, vector<1x1x128xf32>,
    %10 = arith.mulf %2, %2 : vector<64x128xf32>
    %cst_9 = arith.constant dense<0.000000e+00> : vector<128xf32>
    %11 = vector.multi_reduction <add>, %10, %cst_9 [0] : vector<64x128xf32> to vector<128xf32>
    %12 = vector.shape_cast %11 : vector<128xf32> to vector<1x128xf32>
    %c0_10 = arith.constant 0 : index
    %c1 = arith.constant 1 : index
    %c0_11 = arith.constant 0 : index
    %13 = vector.load %arg4[%c0_10, %c1, %c0_11] : memref<1x2x128xf32, #tpu.memory_space<vmem>>, vector<1x1x128xf32>
    %14 = vector.shape_cast %13 : vector<1x1x128xf32> to vector<1x128xf32>
    %15 = vector.shape_cast %12 : vector<1x128xf32> to vector<1x1x128xf32>
    tpu.vector_store %arg4[%c0_10, %c1, %c0_11], %15 {strides = array<i32>} : memref<1x2x128xf32, #tpu.memory_space<vmem>>, vector<1x1x128xf32>,
    return
  }
  func.func @transform_0(%arg0: i32) -> (i32, i32) {
    %c0_i32 = arith.constant 0 : i32
    %c0_i32_0 = arith.constant 0 : i32
    return %arg0, %c0_i32 : i32, i32
  }
  func.func @transform_1(%arg0: i32) -> (i32, i32) {
    %c0_i32 = arith.constant 0 : i32
    %c0_i32_0 = arith.constant 0 : i32
    %c0_i32_1 = arith.constant 0 : i32
    return %c0_i32, %c0_i32_0 : i32, i32
  }
  func.func @transform_2(%arg0: i32) -> (i32, i32) {
    %c0_i32 = arith.constant 0 : i32
    %c0_i32_0 = arith.constant 0 : i32
    return %arg0, %c0_i32 : i32, i32
  }
  func.func @transform_3(%arg0: i32) -> (i32, i32, i32) {
    %c0_i32 = arith.constant 0 : i32
    %c0_i32_0 = arith.constant 0 : i32
    %c0_i32_1 = arith.constant 0 : i32
    return %arg0, %c0_i32, %c0_i32_0 : i32, i32, i32
  }
}

</mosaic_0001>

<llo_original>
// kernel: tpu_custom_call.1
$region0: #{tpu_custom_call.1}
  #allocation0 [shape = 'u32[]', space=smem, size = 0x4, offset = 0x4, fixed_abs, tag = 'smem constant byte address 0x4 - core index']
  #allocation1 [shape = 'u32[144,128]{1,0:T(1,128)}', space=vmem, size = 0x12000, scoped, tag = 'internal scratch']
  %s0 = inlined_call_operand.hbm [shape: bf16[128,128], index: 0, kind: input, shape index: {}]
  %s1 = inlined_call_operand.hbm [shape: bf16[128,128], index: 1, kind: input, shape index: {}]
  %s2 = inlined_call_operand.hbm [shape: bf16[128,128], index: 2, kind: output, shape index: {0}]
  %s3 = inlined_call_operand.hbm [shape: f32[2,2,128], index: 3, kind: output, shape index: {1}]
  %4 = xla_tuple %s2, %s3
  %s5 = sld [smem:[#allocation0]]
  $region57: #{tpu_custom_call.1} parent=0
    _
  %s7 = ssub.s32 1, %s5
  %s8 = scalar_select 0, %s7, %s5
  $region1: #{tpu_custom_call.1} parent=0
    #allocation2 [shape = 'u8[32768]{0}', space=vmem, size = 0x8000, scoped, tag = 'input window, operand 0']
    #allocation3 [shape = 's32[2]{0}', space=sflag, size = 0x8, scoped, tag = 'scoped memory for tpu_custom_call.1']
    #allocation4 [shape = 's32[2]{0}', space=sflag, size = 0x8, scoped, tag = 'scoped memory for tpu_custom_call.1']
    #allocation5 [shape = 'u8[32768]{0}', space=vmem, size = 0x8000, scoped, tag = 'input window, operand 1, single buffered']
    #allocation6 [shape = 's32[1]{0}', space=sflag, size = 0x4, scoped, tag = 'scoped memory for tpu_custom_call.1']
    #allocation7 [shape = 'u8[32768]{0}', space=vmem, size = 0x8000, scoped, tag = 'output window, operand 0']
    #allocation8 [shape = 'u8[2048]{0}', space=vmem, size = 0x800, scoped, tag = 'output window, operand 1']
    #allocation9 [shape = 's32[2]{0}', space=sflag, size = 0x8, scoped, tag = 'scoped memory for tpu_custom_call.1']
    %9 = vsyncpa [#allocation3], 0
    %s10 = scalar_lea.sflag [#allocation3], 1
    %11 = vsyncpa %s10, 0
    %12 = vsyncpa [#allocation6], 0
    %13 = vsyncpa [#allocation4], 0
    %s14 = scalar_lea.sflag [#allocation4], 1
    %15 = vsyncpa %s14, 0
    %16 = vsyncpa [#allocation9], 0
    %s17 = scalar_lea.sflag [#allocation9], 1
    %18 = vsyncpa %s17, 0
    loop: start=0, step=1, limit=4
    $region2: #{tpu_custom_call.1} parent=1 // loop_pre_header
      _
    $region3: #{tpu_custom_call.1} parent=1 // loop_header
      %s20 = sphi 0, %s24
      %p21 = scmp.ge.s32.totalorder %s20, 4
      %s30 = sphi 0, %s32
      %s33 = sphi 0, %s30
      %s34 = sphi 0, %s33
      %s50 = sphi 0, %s34
      %s54 = sphi 0, %s54
      %s56 = sphi 0, %s54
      %s57 = sphi 0, %s56
      %s71 = sphi 0, %s57
      %s77 = sphi 0, %s79
      %s80 = sphi 0, %s77
      %s81 = sphi 0, %s80
      %s97 = sphi 0, %s81
      %s103 = sphi 0, %s105
      %s106 = sphi 0, %s103
      %s107 = sphi 0, %s106
      %s123 = sphi 0, %s107
    $region4: #{tpu_custom_call.1} parent=1 // loop_header_branch
      %23 = sbr.rel (%p21) target = $region8
    $region5: #{tpu_custom_call.1} parent=1 // loop_body
      %s25 = ssub.s32 %s20, 1
      %s26 = ssub.s32 %s20, 2
      %s27 = sadd.s32 %s20, 1
      %s28 = ssub.s32 %s20, %s27
      %p29 = scmp.eq.s32.totalorder %s28, 0
      %s31 = sadd.s32 %s30, 1
      %s32 = scalar_select %p29, %s30, %s31
      %p35 = pneg %p29
      %p36 = scmp.eq.s32.totalorder %s20, 1
      %p37 = por %p35, %p36
      %p38 = scmp.ne.s32.totalorder %s30, %s33
      %p39 = scmp.eq.s32.totalorder %s20, 0
      %p40 = por %p38, %p39
      %p41 = scmp.ne.s32.totalorder %s30, %s33
      %p42 = scmp.eq.s32.totalorder %s25, 1
      %p43 = por %p41, %p42
      %p44 = scmp.ne.s32.totalorder %s33, %s34
      %p45 = scmp.eq.s32.totalorder %s25, 0
      %p46 = por %p44, %p45
      %p47 = scmp.ne.s32.totalorder %s33, %s34
      %p48 = scmp.eq.s32.totalorder %s26, 1
      %p49 = por %p47, %p48
      %p51 = scmp.ne.s32.totalorder %s34, %s50
      %p52 = scmp.eq.s32.totalorder %s26, 0
      %p53 = por %p51, %p52
      %s55 = sadd.s32 %s54, 1
      %p58 = scmp.eq.s32.totalorder %s20, 1
      %p59 = scmp.ne.s32.totalorder %s54, %s56
      %p60 = scmp.eq.s32.totalorder %s20, 0
      %p61 = por %p59, %p60
      %p62 = scmp.ne.s32.totalorder %s54, %s56
      %p63 = scmp.eq.s32.totalorder %s25, 1
      %p64 = por %p62, %p63
      %p65 = scmp.ne.s32.totalorder %s56, %s57
      %p66 = scmp.eq.s32.totalorder %s25, 0
      %p67 = por %p65, %p66
      %p68 = scmp.ne.s32.totalorder %s56, %s57
      %p69 = scmp.eq.s32.totalorder %s26, 1
      %p70 = por %p68, %p69
      %p72 = scmp.ne.s32.totalorder %s57, %s71
      %p73 = scmp.eq.s32.totalorder %s26, 0
      %p74 = por %p72, %p73
      %s75 = ssub.s32 %s20, %s27
      %p76 = scmp.eq.s32.totalorder %s75, 0
      %s78 = sadd.s32 %s77, 1
      %s79 = scalar_select %p76, %s77, %s78
      %p82 = pneg %p76
      %p83 = scmp.eq.s32.totalorder %s20, 1
      %p84 = por %p82, %p83
      %p85 = scmp.ne.s32.totalorder %s77, %s80
      %p86 = scmp.eq.s32.totalorder %s20, 0
      %p87 = por %p85, %p86
      %p88 = scmp.ne.s32.totalorder %s77, %s80
      %p89 = scmp.eq.s32.totalorder %s25, 1
      %p90 = por %p88, %p89
      %p91 = scmp.ne.s32.totalorder %s80, %s81
      %p92 = scmp.eq.s32.totalorder %s25, 0
      %p93 = por %p91, %p92
      %p94 = scmp.ne.s32.totalorder %s80, %s81
      %p95 = scmp.eq.s32.totalorder %s26, 1
      %p96 = por %p94, %p95
      %p98 = scmp.ne.s32.totalorder %s81, %s97
      %p99 = scmp.eq.s32.totalorder %s26, 0
      %p100 = por %p98, %p99
      %s101 = ssub.s32 %s20, %s27
      %p102 = scmp.eq.s32.totalorder %s101, 0
      %s104 = sadd.s32 %s103, 1
      %s105 = scalar_select %p102, %s103, %s104
      %p108 = pneg %p102
      %p109 = scmp.eq.s32.totalorder %s20, 1
      %p110 = por %p108, %p109
      %p111 = scmp.ne.s32.totalorder %s103, %s106
      %p112 = scmp.eq.s32.totalorder %s20, 0
      %p113 = por %p111, %p112
      %p114 = scmp.ne.s32.totalorder %s103, %s106
      %p115 = scmp.eq.s32.totalorder %s25, 1
      %p116 = por %p114, %p115
      %p117 = scmp.ne.s32.totalorder %s106, %s107
      %p118 = scmp.eq.s32.totalorder %s25, 0
      %p119 = por %p117, %p118
      %p120 = scmp.ne.s32.totalorder %s106, %s107
      %p121 = scmp.eq.s32.totalorder %s26, 1
      %p122 = por %p120, %p121
      %p124 = scmp.ne.s32.totalorder %s107, %s123
      %p125 = scmp.eq.s32.totalorder %s26, 0
      %p126 = por %p124, %p125
      %p127 = scmp.le.s32.totalorder 1, %s20
      %p128 = scmp.lt.s32.totalorder %s20, 3
      %p129 = pnand %p127, %p128
      %p130 = pneg %p129
      // Predicated region
      $region9: #{tpu_custom_call.1} parent=5 // pred_check
        _
      $region10: #{tpu_custom_call.1} parent=5 // pred_check_branch
        %132 = sbr.rel (%p129) target = $region12
      $region11: #{tpu_custom_call.1} parent=5 // pred_region
        %s133 = ssub.s32 %s20, 1
        // Predicated region
        $region13: #{tpu_custom_call.1} parent=11 // pred_check
          %p134 = pneg %p67
        $region14: #{tpu_custom_call.1} parent=11 // pred_check_branch
          %136 = sbr.rel (%p134) target = $region16
        $region15: #{tpu_custom_call.1} parent=11 // pred_region
          %s138 = ssub.s32 1024, 1024
          %139 = vsyncadd [#allocation6], %s138
          %s140 = sshll.u32 [#allocation5], 4
          %s141 = int_to_ptr.vmem [resolvable:$true] %s140
          %146 = dma.hbm_to_vmem [thread:$0]  %s1, 1024, %s141, [#allocation6], 64, 64, 4
        $region16: #{tpu_custom_call.1} parent=11 // pred_fallthru
          _
      $region12: #{tpu_custom_call.1} parent=5 // pred_fallthru
        _
      %p147 = scmp.lt.s32.totalorder %s20, 2
      // Predicated region
      $region17: #{tpu_custom_call.1} parent=5 // pred_check
        %p148 = pneg %p147
      $region18: #{tpu_custom_call.1} parent=5 // pred_check_branch
        %150 = sbr.rel (%p148) target = $region20
      $region19: #{tpu_custom_call.1} parent=5 // pred_region
        // Predicated region
        $region21: #{tpu_custom_call.1} parent=19 // pred_check
          %p151 = pneg %p40
        $region22: #{tpu_custom_call.1} parent=19 // pred_check_branch
          %153 = sbr.rel (%p151) target = $region24
        $region23: #{tpu_custom_call.1} parent=19 // pred_region
          %s154 = sand.u32 %s30, 1
          %s155 = scalar_lea.sflag [#allocation3], %s154
          %s156 = sand.u32 %s30, 1
          %s157 = smul.addr %s156, 32
          %s158 = scalar_lea.vmem [#allocation2], %s157
          %s159 = smul.u32 8, %s20
          %s161 = ssub.s32 512, 512
          %162 = vsyncadd %s155, %s161
          %s163 = smul.addr %s159, 64
          %s164 = scalar_lea.hbm %s0, %s163
          %s165 = sshll.u32 %s158, 4
          %s166 = int_to_ptr.vmem [resolvable:$true] %s165
          %171 = dma.hbm_to_vmem [thread:$0]  %s164, 512, %s166, %s155, 64, 64, 4
        $region24: #{tpu_custom_call.1} parent=19 // pred_fallthru
          _
      $region20: #{tpu_custom_call.1} parent=5 // pred_fallthru
        _
      %p172 = scmp.le.s32.totalorder 1, %s20
      %p173 = scmp.lt.s32.totalorder %s20, 3
      %p174 = pnand %p172, %p173
      %p175 = pneg %p174
      // Predicated region
      $region25: #{tpu_custom_call.1} parent=5 // pred_check
        _
      $region26: #{tpu_custom_call.1} parent=5 // pred_check_branch
        %177 = sbr.rel (%p174) target = $region28
      $region27: #{tpu_custom_call.1} parent=5 // pred_region
        %s178 = ssub.s32 %s20, 1
        %s179 = sand.u32 %s33, 1
        %s180 = scalar_lea.sflag [#allocation3], %s179
        %s181 = sand.u32 %s33, 1
        %s182 = smul.addr %s181, 32
        %s183 = scalar_lea.vmem [#allocation2], %s182
        // Predicated region
        $region29: #{tpu_custom_call.1} parent=27 // pred_check
          %p184 = pneg %p46
        $region30: #{tpu_custom_call.1} parent=27 // pred_check_branch
          %186 = sbr.rel (%p184) target = $region32
        $region31: #{tpu_custom_call.1} parent=27 // pred_region
          %187 = dma.done %s180, 512
        $region32: #{tpu_custom_call.1} parent=27 // pred_fallthru
          _
        // Predicated region
        $region33: #{tpu_custom_call.1} parent=27 // pred_check
          %p188 = pneg %p67
        $region34: #{tpu_custom_call.1} parent=27 // pred_check_branch
          %190 = sbr.rel (%p188) target = $region36
        $region35: #{tpu_custom_call.1} parent=27 // pred_region
          %191 = dma.done [#allocation6], 1024
        $region36: #{tpu_custom_call.1} parent=27 // pred_fallthru
          _
        %s192 = sand.u32 %s33, 1
        %s193 = scalar_lea.sflag [#allocation3], %s192
        %s194 = sand.u32 %s33, 1
        %s195 = smul.addr %s194, 32
        %s196 = scalar_lea.vmem [#allocation2], %s195
        %p197 = pneg %p46
        %p198 = pneg %p43
        %p199 = pneg %p67
        %p200 = pneg %p64
        %p201 = pneg %p93
        %p202 = pneg %p90
        %s203 = sand.u32 %s80, 1
        %s204 = scalar_lea.sflag [#allocation4], %s203
        %s205 = sand.u32 %s80, 1
        %s206 = smul.addr %s205, 32
        %s207 = scalar_lea.vmem [#allocation7], %s206
        %p208 = pneg %p119
        %p209 = pneg %p116
        %s210 = sand.u32 %s106, 1
        %s211 = scalar_lea.sflag [#allocation9], %s210
        %s212 = sand.u32 %s106, 1
        %s213 = smul.addr %s212, 2
        %s214 = scalar_lea.vmem [#allocation8], %s213
        %s215 = smul.u32 8, %s25
        %s216 = smul.u32 8, %s25
        %v218 = vld [vmem:[%s183] sm:$0xf]
        %v219 = vld [vmem:[%s183 + $0x4] sm:$0xf]
        %v220 = vld [vmem:[%s183 + $0x8] sm:$0xf]
        %v221 = vld [vmem:[%s183 + $0xc] sm:$0xf]
        %v222 = vld [vmem:[%s183 + $0x10] sm:$0xf]
        %v223 = vld [vmem:[%s183 + $0x14] sm:$0xf]
        %v224 = vld [vmem:[%s183 + $0x18] sm:$0xf]
        %v225 = vld [vmem:[%s183 + $0x1c] sm:$0xf]
        %v226 = vld [vmem:[#allocation5] sm:$0xf]
        %v227 = vld [vmem:[#allocation5 + $0x4] sm:$0xf]
        %v228 = vld [vmem:[#allocation5 + $0x8] sm:$0xf]
        %v229 = vld [vmem:[#allocation5 + $0xc] sm:$0xf]
        %v230 = vld [vmem:[#allocation5 + $0x10] sm:$0xf]
        %v231 = vld [vmem:[#allocation5 + $0x14] sm:$0xf]
        %v232 = vld [vmem:[#allocation5 + $0x18] sm:$0xf]
        %v233 = vld [vmem:[#allocation5 + $0x1c] sm:$0xf]
        %v234 = vld [vmem:[#allocation5 + $0x20] sm:$0xf]
        %v235 = vld [vmem:[#allocation5 + $0x24] sm:$0xf]
        %v236 = vld [vmem:[#allocation5 + $0x28] sm:$0xf]
        %v237 = vld [vmem:[#allocation5 + $0x2c] sm:$0xf]
        %v238 = vld [vmem:[#allocation5 + $0x30] sm:$0xf]
        %v239 = vld [vmem:[#allocation5 + $0x34] sm:$0xf]
        %v240 = vld [vmem:[#allocation5 + $0x38] sm:$0xf]
        %v241 = vld [vmem:[#allocation5 + $0x3c] sm:$0xf]
        %v250 = vunpack.c.l.b16 %v218
        %v251 = vunpack.c.l.b16 %v219
        %v252 = vunpack.c.l.b16 %v220
        %v253 = vunpack.c.l.b16 %v221
        %v254 = vunpack.c.l.b16 %v222
        %v255 = vunpack.c.l.b16 %v223
        %v256 = vunpack.c.l.b16 %v224
        %v257 = vunpack.c.l.b16 %v225
        %v258 = vpack.c.b16 %v251, %v250
        %v259 = vpack.c.b16 %v253, %v252
        %v260 = vpack.c.b16 %v255, %v254
        %v261 = vpack.c.b16 %v257, %v256
        %v282 = vunpack.c.l.b16 %v226
        %v283 = vunpack.c.l.b16 %v227
        %v284 = vunpack.c.l.b16 %v228
        %v285 = vunpack.c.l.b16 %v229
        %v286 = vunpack.c.l.b16 %v230
        %v287 = vunpack.c.l.b16 %v231
        %v288 = vunpack.c.l.b16 %v232
        %v289 = vunpack.c.l.b16 %v233
        %v290 = vunpack.c.l.b16 %v234
        %v291 = vunpack.c.l.b16 %v235
        %v292 = vunpack.c.l.b16 %v236
        %v293 = vunpack.c.l.b16 %v237
        %v294 = vunpack.c.l.b16 %v238
        %v295 = vunpack.c.l.b16 %v239
        %v296 = vunpack.c.l.b16 %v240
        %v297 = vunpack.c.l.b16 %v241
        %v298 = vpack.c.b16 %v283, %v282
        %v299 = vpack.c.b16 %v285, %v284
        %v300 = vpack.c.b16 %v287, %v286
        %v301 = vpack.c.b16 %v289, %v288
        %v302 = vpack.c.b16 %v291, %v290
        %v303 = vpack.c.b16 %v293, %v292
        %v304 = vpack.c.b16 %v295, %v294
        %v305 = vpack.c.b16 %v297, %v296
        %314 = vmatprep.subr.bf16.mxu0 0
        %315 = vmatpush1.bf16.msra.mxu0 %v298
        %316 = vmatprep.subr.bf16.mxu0 0
        %317 = vmatpush1.bf16.msra.mxu0 %v299
        %318 = vmatprep.subr.bf16.mxu0 0
        %319 = vmatpush1.bf16.msra.mxu0 %v300
        %320 = vmatprep.subr.bf16.mxu0 0
        %321 = vmatpush1.bf16.msra.mxu0 %v301
        %322 = vmatprep.subr.bf16.mxu0 0
        %323 = vmatpush1.bf16.msra.mxu0 %v302
        %324 = vmatprep.subr.bf16.mxu0 0
        %325 = vmatpush1.bf16.msra.mxu0 %v303
        %326 = vmatprep.subr.bf16.mxu0 0
        %327 = vmatpush1.bf16.msra.mxu0 %v304
        %328 = vmatprep.subr.bf16.mxu0 0
        %329 = vmatpush1.bf16.msra.mxu0 %v305
        %330 = vmatprep.subr.bf16.mxu0 0
        %331 = vmatpush1.bf16.msra.mxu0 0
        %332 = vmatprep.subr.bf16.mxu0 0
        %333 = vmatpush1.bf16.msra.mxu0 0
        %334 = vmatprep.subr.bf16.mxu0 0
        %335 = vmatpush1.bf16.msra.mxu0 0
        %336 = vmatprep.subr.bf16.mxu0 0
        %337 = vmatpush1.bf16.msra.mxu0 0
        %338 = vmatprep.subr.bf16.mxu0 0
        %339 = vmatpush1.bf16.msra.mxu0 0
        %340 = vmatprep.subr.bf16.mxu0 0
        %341 = vmatpush1.bf16.msra.mxu0 0
        %342 = vmatprep.subr.bf16.mxu0 0
        %343 = vmatpush1.bf16.msra.mxu0 0
        %344 = vmatprep.subr.bf16.mxu0 0
        %345 = vmatpush1.bf16.msra.mxu0 0
        %346 = vmatprep.mubr.bf16.mxu0 0
        %347 = vmatmul.mubr.bf16.gmra.mrb[0].mxu0 %v258
        %v348 = vpop.f32.mrb[0].mxu0
        %v349 = vadd.f32 0.0, %v348
        %v350 = vpop.f32.mrb[0].mxu0
        %v351 = vpop.f32.mrb[0].mxu0
        %v352 = vadd.f32 0.0, %v351
        %v353 = vpop.f32.mrb[0].mxu0
        %354 = vmatprep.mubr.bf16.mxu0 0
        %355 = vmatmul.mubr.bf16.gmra.mrb[0].mxu0 %v259
        %v356 = vpop.f32.mrb[0].mxu0
        %v357 = vadd.f32 0.0, %v356
        %v358 = vpop.f32.mrb[0].mxu0
        %v359 = vpop.f32.mrb[0].mxu0
        %v360 = vadd.f32 0.0, %v359
        %v361 = vpop.f32.mrb[0].mxu0
        %362 = vmatprep.mubr.bf16.mxu0 0
        %363 = vmatmul.mubr.bf16.gmra.mrb[0].mxu0 %v260
        %v364 = vpop.f32.mrb[0].mxu0
        %v365 = vadd.f32 0.0, %v364
        %v366 = vpop.f32.mrb[0].mxu0
        %v367 = vpop.f32.mrb[0].mxu0
        %v368 = vadd.f32 0.0, %v367
        %v369 = vpop.f32.mrb[0].mxu0
        %370 = vmatprep.mubr.bf16.mxu0 0
        %371 = vmatmul.mubr.bf16.gmra.mrb[0].mxu0 %v261
        %v372 = vpop.f32.mrb[0].mxu0
        %v373 = vadd.f32 0.0, %v372
        %v374 = vpop.f32.mrb[0].mxu0
        %v375 = vpop.f32.mrb[0].mxu0
        %v376 = vadd.f32 0.0, %v375
        %v377 = vpop.f32.mrb[0].mxu0
        %378 = vdwg.mxu0
        %v379 = vpack.c.bf16 %v352, %v349
        %v380 = vpack.c.bf16 %v360, %v357
        %v381 = vpack.c.bf16 %v368, %v365
        %v382 = vpack.c.bf16 %v376, %v373
        %v387 = vunpack.c.l.b16 %v379
        %v388 = vunpack.c.h.b16 %v379
        %v389 = vunpack.c.l.b16 %v380
        %v390 = vunpack.c.h.b16 %v380
        %v391 = vunpack.c.l.b16 %v381
        %v392 = vunpack.c.h.b16 %v381
        %v393 = vunpack.c.l.b16 %v382
        %v394 = vunpack.c.h.b16 %v382
        %v395 = vpack.c.b16 %v387, %v387
        %v396 = vpack.c.b16 %v388, %v388
        %v397 = vpack.c.b16 %v389, %v389
        %v398 = vpack.c.b16 %v390, %v390
        %v399 = vpack.c.b16 %v391, %v391
        %v400 = vpack.c.b16 %v392, %v392
        %v401 = vpack.c.b16 %v393, %v393
        %v402 = vpack.c.b16 %v394, %v394
        %411 = vst [vmem:[%s207] sm:$0xf] %v395
        %412 = vst [vmem:[%s207 + $0x4] sm:$0xf] %v396
        %413 = vst [vmem:[%s207 + $0x8] sm:$0xf] %v397
        %414 = vst [vmem:[%s207 + $0xc] sm:$0xf] %v398
        %415 = vst [vmem:[%s207 + $0x10] sm:$0xf] %v399
        %416 = vst [vmem:[%s207 + $0x14] sm:$0xf] %v400
        %417 = vst [vmem:[%s207 + $0x18] sm:$0xf] %v401
        %418 = vst [vmem:[%s207 + $0x1c] sm:$0xf] %v402
        %v419 = vadd.f32 %v349, %v352
        %v420 = vadd.f32 %v419, %v357
        %v421 = vadd.f32 %v420, %v360
        %v422 = vadd.f32 %v421, %v365
        %v423 = vadd.f32 %v422, %v368
        %v424 = vadd.f32 %v423, %v373
        %v425 = vadd.f32 %v424, %v376
        %v426 = vrot.slane %v425, 4
        %v427 = vadd.f32 %v425, %v426
        %v428 = vrot.slane %v427, 2
        %v429 = vadd.f32 %v427, %v428
        %v430 = vrot.slane %v429, 1
        %v431 = vadd.f32 %v429, %v430
        %432 = vst [vmem:[%s214] sm:$0x1] %v431
        %v433 = vmul.f32 %v349, %v349
        %v434 = vmul.f32 %v352, %v352
        %v435 = vmul.f32 %v357, %v357
        %v436 = vmul.f32 %v360, %v360
        %v437 = vmul.f32 %v365, %v365
        %v438 = vmul.f32 %v368, %v368
        %v439 = vmul.f32 %v373, %v373
        %v440 = vmul.f32 %v376, %v376
        %v441 = vadd.f32 %v433, %v434
        %v442 = vadd.f32 %v441, %v435
        %v443 = vadd.f32 %v442, %v436
        %v444 = vadd.f32 %v443, %v437
        %v445 = vadd.f32 %v444, %v438
        %v446 = vadd.f32 %v445, %v439
        %v447 = vadd.f32 %v446, %v440
        %v448 = vrot.slane %v447, 4
        %v449 = vadd.f32 %v447, %v448
        %v450 = vrot.slane %v449, 2
        %v451 = vadd.f32 %v449, %v450
        %v452 = vrot.slane %v451, 1
        %v453 = vadd.f32 %v451, %v452
        %454 = vst [vmem:[%s214 + $0x1] sm:$0x1] %v453
        %s455 = sand.u32 %s80, 1
        %s456 = scalar_lea.sflag [#allocation4], %s455
        %s457 = sand.u32 %s80, 1
        %s458 = smul.addr %s457, 32
        %s459 = scalar_lea.vmem [#allocation7], %s458
        %s460 = sand.u32 %s106, 1
        %s461 = scalar_lea.sflag [#allocation9], %s460
        %s462 = sand.u32 %s106, 1
        %s463 = smul.addr %s462, 2
        %s464 = scalar_lea.vmem [#allocation8], %s463
        // Predicated region
        $region37: #{tpu_custom_call.1} parent=27 // pred_check
          %p465 = pneg %p90
        $region38: #{tpu_custom_call.1} parent=27 // pred_check_branch
          %467 = sbr.rel (%p465) target = $region40
        $region39: #{tpu_custom_call.1} parent=27 // pred_region
          %s468 = smul.u32 8, %s25
          %s470 = ssub.s32 512, 512
          %471 = vsyncadd %s456, %s470
          %s472 = smul.addr %s468, 64
          %s473 = scalar_lea.hbm %s2, %s472
          %s474 = sshll.u32 %s459, 4
          %s475 = int_to_ptr.vmem [resolvable:$true] %s474
          %480 = dma.vmem_to_hbm [thread:$0]  %s475, 512, %s473, %s456, 64, 64, 4
        $region40: #{tpu_custom_call.1} parent=27 // pred_fallthru
          _
        // Predicated region
        $region41: #{tpu_custom_call.1} parent=27 // pred_check
          %p481 = pneg %p116
        $region42: #{tpu_custom_call.1} parent=27 // pred_check_branch
          %483 = sbr.rel (%p481) target = $region44
        $region43: #{tpu_custom_call.1} parent=27 // pred_region
          %s485 = ssub.s32 32, 32
          %486 = vsyncadd %s461, %s485
          %s487 = smul.addr %s25, 32
          %s488 = scalar_lea.hbm %s3, %s487
          %s490 = sshll.u32 %s464, 4
          %s491 = int_to_ptr.vmem [resolvable:$true] %s490
          %493 = dma.vmem_to_hbm [thread:$0]  %s491, 32, %s488, %s461
        $region44: #{tpu_custom_call.1} parent=27 // pred_fallthru
          _
      $region28: #{tpu_custom_call.1} parent=5 // pred_fallthru
        _
      %p494 = scmp.le.s32.totalorder 2, %s20
      // Predicated region
      $region45: #{tpu_custom_call.1} parent=5 // pred_check
        %p495 = pneg %p494
      $region46: #{tpu_custom_call.1} parent=5 // pred_check_branch
        %497 = sbr.rel (%p495) target = $region48
      $region47: #{tpu_custom_call.1} parent=5 // pred_region
        %s498 = ssub.s32 %s20, 2
        // Predicated region
        $region49: #{tpu_custom_call.1} parent=47 // pred_check
          %p499 = pneg %p96
        $region50: #{tpu_custom_call.1} parent=47 // pred_check_branch
          %501 = sbr.rel (%p499) target = $region52
        $region51: #{tpu_custom_call.1} parent=47 // pred_region
          %s502 = sand.u32 %s81, 1
          %s503 = scalar_lea.sflag [#allocation4], %s502
          %s504 = sand.u32 %s81, 1
          %s505 = smul.addr %s504, 32
          %s506 = scalar_lea.vmem [#allocation7], %s505
          %507 = dma.done %s503, 512
        $region52: #{tpu_custom_call.1} parent=47 // pred_fallthru
          _
        // Predicated region
        $region53: #{tpu_custom_call.1} parent=47 // pred_check
          %p508 = pneg %p122
        $region54: #{tpu_custom_call.1} parent=47 // pred_check_branch
          %510 = sbr.rel (%p508) target = $region56
        $region55: #{tpu_custom_call.1} parent=47 // pred_region
          %s511 = sand.u32 %s107, 1
          %s512 = scalar_lea.sflag [#allocation9], %s511
          %s513 = sand.u32 %s107, 1
          %s514 = smul.addr %s513, 2
          %s515 = scalar_lea.vmem [#allocation8], %s514
          %516 = dma.done %s512, 32
        $region56: #{tpu_custom_call.1} parent=47 // pred_fallthru
          _
      $region48: #{tpu_custom_call.1} parent=5 // pred_fallthru
        _
    $region6: #{tpu_custom_call.1} parent=1 // loop_footer
      %s24 = sadd.s32 1, %s20
    $region7: #{tpu_custom_call.1} parent=1 // loop_footer_branch
      %19 = sbr.rel target = $region3
    $region8: #{tpu_custom_call.1} parent=1 // loop_exit
      _
    %517 = vsyncpa [#allocation3], 1
    %s518 = scalar_lea.sflag [#allocation3], 1
    %519 = vsyncpa %s518, 1
    %520 = vsyncpa [#allocation6], 1
    %521 = vsyncpa [#allocation4], 1
    %s522 = scalar_lea.sflag [#allocation4], 1
    %523 = vsyncpa %s522, 1
    %524 = vsyncpa [#allocation9], 1
    %s525 = scalar_lea.sflag [#allocation9], 1
    %526 = vsyncpa %s525, 1

</llo_original>
